<compile_context>
chip_gen: v5e
topology: v5e:2x2
jax: 0.10.0
libtpu: 0.0.40
codegen_flags: <defaults>
</compile_context>

<pallas_src>
import math

import jax
import jax.numpy as jnp
import numpy as np
from jax.experimental import pallas as pl
from jax.experimental.pallas import tpu as pltpu  # noqa: F401  (TPU backend)

# --- model hyper-parameters (module-level globals in the PyTorch source) ---
d_model = 32
d_ff = 64
num_heads = 4
d_k = d_model // num_heads
drop_out_rate = 0.1  # dropout is identity at inference
EPS = 1e-6
NEG_INF = 1.0e9
LANES = 128


# ----------------------------- host-side helpers ------------------------------
def _sel_host(rows, cols, row_blk, col_blk):
    """0/1 selector matrix: 1 where row//row_blk == col//col_blk (host build)."""
    r = np.arange(rows)[:, None] // row_blk
    c = np.arange(cols)[None, :] // col_blk
    return jnp.asarray((r == c).astype(np.float32))


def _slab_layout(nks, nkc):
    """Row-band layout of the lane-dense (rows, 128) weight slab.

    Every matrix sits at lane offset 0 of its own row band (row offsets are
    multiples of 32), so in-kernel carve-outs are plain static ref slices.
    """
    hs, hc = num_heads * nks, num_heads * nkc
    entries = [
        ("wqkv1", d_model, 3 * d_model),   # fused self-attn QKV (Q pre-scaled)
        ("w0s", d_model, d_model),         # self-attn output proj
        ("w0c", d_model, d_model),         # cross-attn output proj
        ("wqc", d_model, d_model),         # cross-attn Q proj (pre-scaled)
        ("wkvc", d_model, 2 * d_model),    # fused cross-attn K|V
        ("wf1", d_model, d_ff),            # FFN linear 1
        ("wf2", d_ff, d_model),            # FFN linear 2
        ("selks", d_model, hs),            # selector: widened K, self-attn
        ("selvs", hs, d_model),            # selector: widened V / denom, self
        ("selkc", d_model, hc),            # selector: widened K, cross-attn
        ("selvc", hc, d_model),            # selector: widened V / denom, cross
    ]
    layout, r = {}, 0
    for name, rows, cols in entries:
        layout[name] = (r, rows, cols)
        r += rows
    return layout, r


def pack_params(p, B, T, S):
    """PyTorch-layout params -> (weight slab (rows,128), vector slab (8,128))."""
    scale = 1.0 / math.sqrt(d_k)
    t = lambda w: w.T  # nn.Linear weight (out, in) -> (in, out)
    sa, ca, ff = p["self_attn"], p["cross_attn"], p["ffn"]
    nks, nkc = B * T, B * S
    layout, total_rows = _slab_layout(nks, nkc)

    mats = {
        "wqkv1": jnp.concatenate([t(sa["wq"]) * scale, t(sa["wk"]), t(sa["wv"])], axis=1),
        "w0s": t(sa["w0"]),
        "w0c": t(ca["w0"]),
        "wqc": t(ca["wq"]) * scale,
        "wkvc": jnp.concatenate([t(ca["wk"]), t(ca["wv"])], axis=1),
        "wf1": t(ff["w1"]),
        "wf2": t(ff["w2"]),
        "selks": _sel_host(d_model, num_heads * nks, d_k, nks),
        "selvs": _sel_host(num_heads * nks, d_model, nks, d_k),
        "selkc": _sel_host(d_model, num_heads * nkc, d_k, nkc),
        "selvc": _sel_host(num_heads * nkc, d_model, nkc, d_k),
    }
    w_slab = jnp.zeros((total_rows, LANES), jnp.float32)
    for name, (r, rows, cols) in layout.items():
        w_slab = w_slab.at[r:r + rows, :cols].set(mats[name])

    def row(*parts):
        v = jnp.concatenate(parts)
        return jnp.pad(v, (0, LANES - v.shape[0]))

    vec_slab = jnp.stack([
        row(sa["bq"] * scale, sa["bk"], sa["bv"]),               # fused QKV bias (96)
        row(ca["bk"], ca["bv"], ff["b1"]),                       # [bkv2 (64) | bf1 (64)]
        row(p["ln1_g"], p["ln1_b"], p["ln2_g"], p["ln2_b"]),
        row(p["ln3_g"], p["ln3_b"], sa["b0"], ca["b0"]),
        row(ff["b2"], ca["bq"] * scale),
        jnp.zeros((LANES,), jnp.float32),
        jnp.zeros((LANES,), jnp.float32),
        jnp.zeros((LANES,), jnp.float32),
    ])                                                           # (8, 128)
    return w_slab, vec_slab


def _build_bias(mask, B, Tq, Tk):
    """(B, 1|Tq, Tk) 0/1 mask -> (B*Tq, H*B*Tk) additive bias (0 keep / -1e9)."""
    m = jnp.broadcast_to(mask.astype(jnp.float32), (B, Tq, Tk))
    row_b = jnp.repeat(jnp.arange(B), Tq)
    col_b = jnp.repeat(jnp.arange(B), Tk)
    same = (row_b[:, None] == col_b[None, :]).astype(jnp.float32)   # (B*Tq, B*Tk)
    own = jnp.tile(m.reshape(B * Tq, Tk), (1, B))                   # row's own mask
    keep = same * own
    bias = (keep - 1.0) * NEG_INF
    return jnp.tile(bias, (1, num_heads))                           # (B*Tq, H*B*Tk)


def build_bias_slab(e_mask, d_mask, B, T, S):
    """Build once and reuse: [self-attn bias | cross-attn bias], lane-padded."""
    d_bias = _build_bias(d_mask, B, T, T)   # (B*T, H*B*T)
    e_bias = _build_bias(e_mask, B, T, S)   # (B*T, H*B*S)
    slab = jnp.concatenate([d_bias, e_bias], axis=1)
    pad = (-slab.shape[1]) % LANES
    if pad:
        slab = jnp.pad(slab, ((0, 0), (0, pad)))
    return slab


# ----------------------------- in-kernel helpers ------------------------------
def _layernorm(x, g, b):
    # One-pass statistics: both reductions depend only on x, so they overlap.
    mean = jnp.mean(x, axis=-1, keepdims=True)
    msq = jnp.mean(x * x, axis=-1, keepdims=True)
    var = jnp.maximum(msq - mean * mean, 0.0)
    return (x - mean) * jax.lax.rsqrt(var + EPS) * g + b


def _attend(q, k, v, bias, sel_k, sel_v):
    """Multi-head attention with block-diagonal head structure.

    q: (Nq, D) (1/sqrt(d_k) already folded into its projection).
    k, v: (Nk, D);  bias: (Nq, H*Nk) additive (0 keep / -1e9 masked).
    sel_k: (D, H*Nk), sel_v: (H*Nk, D) precomputed 0/1 block selectors.
    Returns (Nq, D) in concatenated-head layout.
    """
    # TODO(synk): fully-masked query rows (all keys masked) would attend
    # uniformly across batches here; not reachable with causal/padding masks.
    k_exp = jnp.tile(k.T, (1, num_heads)) * sel_k                         # (D, H*Nk)
    s = jnp.dot(q, k_exp, preferred_element_type=jnp.float32) + bias
    s = s - jnp.max(s, axis=-1, keepdims=True)
    p = jnp.exp(s)                                                        # masked -> 0
    v_exp = jnp.tile(v, (num_heads, 1)) * sel_v                           # (H*Nk, D)
    # Both matmuls depend only on p -> back-to-back MXU issue.
    o_un = jnp.dot(p, v_exp, preferred_element_type=jnp.float32)          # (Nq, D)
    denom = jnp.dot(p, sel_v, preferred_element_type=jnp.float32)         # per-head denom
    return o_un * pl.reciprocal(denom, approx=True)                       # EUP vrcp


# ------------------------------ kernel factory --------------------------------
def make_decoder_layer(B, T, S):
    nq = B * T
    nkv = B * S
    hnks = num_heads * nq
    hnkc = num_heads * nkv
    layout, _ = _slab_layout(nq, nkv)

    def kernel(xe_ref, bias_ref, w_ref, vec_ref, out_ref):
        # TODO(synk): training-mode dropout would use pltpu.prng_seed /
        # prng_random_bits; at inference it is identity (matches eval nn.Dropout).
        def W(name):
            r, rows, cols = layout[name]
            return w_ref[r:r + rows, 0:cols]

        x = xe_ref[0:nq, :]                 # (B*T, D)
        e = xe_ref[nq:nq + nkv, :]          # (B*S, D)

        bias = bias_ref[...]
        dbias = bias[:, 0:hnks]
        ebias = bias[:, hnks:hnks + hnkc]

        vec = vec_ref[...]                  # (8, 128) == one vreg
        bqkv1 = vec[0:1, 0:3 * d_model]
        bkv2 = vec[1:2, 0:2 * d_model]
        bf1 = vec[1:2, 2 * d_model:2 * d_model + d_ff]
        ln1g, ln1b = vec[2:3, 0:d_model], vec[2:3, d_model:2 * d_model]
        ln2g, ln2b = vec[2:3, 2 * d_model:3 * d_model], vec[2:3, 3 * d_model:4 * d_model]
        ln3g, ln3b = vec[3:4, 0:d_model], vec[3:4, d_model:2 * d_model]
        b0s, b0c = vec[3:4, 2 * d_model:3 * d_model], vec[3:4, 3 * d_model:4 * d_model]
        bf2, bq2 = vec[4:5, 0:d_model], vec[4:5, d_model:2 * d_model]

        # ---- masked self-attention + residual ----
        x1 = _layernorm(x, ln1g, ln1b)
        qkv = jnp.dot(x1, W("wqkv1"), preferred_element_type=jnp.float32) + bqkv1
        attn = _attend(qkv[:, 0:d_model], qkv[:, d_model:2 * d_model],
                       qkv[:, 2 * d_model:3 * d_model], dbias, W("selks"), W("selvs"))
        x = x + jnp.dot(attn, W("w0s"), preferred_element_type=jnp.float32) + b0s

        # ---- cross-attention over encoder output + residual ----
        x2 = _layernorm(x, ln2g, ln2b)
        q2 = jnp.dot(x2, W("wqc"), preferred_element_type=jnp.float32) + bq2
        kv = jnp.dot(e, W("wkvc"), preferred_element_type=jnp.float32) + bkv2
        attn2 = _attend(q2, kv[:, 0:d_model], kv[:, d_model:2 * d_model],
                        ebias, W("selkc"), W("selvc"))
        x = x + jnp.dot(attn2, W("w0c"), preferred_element_type=jnp.float32) + b0c

        # ---- feed-forward + residual ----
        x3 = _layernorm(x, ln3g, ln3b)
        h = jnp.maximum(
            jnp.dot(x3, W("wf1"), preferred_element_type=jnp.float32) + bf1, 0.0)
        x = x + jnp.dot(h, W("wf2"), preferred_element_type=jnp.float32) + bf2

        out_ref[...] = x

    @jax.jit
    def run(x, e_output, bias_slab, w_slab, vec_slab):
        xe = jnp.concatenate(
            [x.reshape(nq, d_model), e_output.reshape(nkv, d_model)], axis=0)
        out = pl.pallas_call(
            kernel,
            out_shape=jax.ShapeDtypeStruct((nq, d_model), jnp.float32),
        )(xe, bias_slab, w_slab, vec_slab)
        return out.reshape(B, T, d_model)

    return run


# --------------------------- independent reference ----------------------------
_HI = jax.lax.Precision.HIGHEST


def _ref_layernorm(x, g, b):
    mean = x.mean(axis=-1, keepdims=True)
    var = ((x - mean) ** 2).mean(axis=-1, keepdims=True)
    return (x - mean) / jnp.sqrt(var + EPS) * g + b


def _ref_mha(q_in, kv_in, mask, w):
    B, Tq, _ = q_in.shape
    Tk = kv_in.shape[1]
    q = jnp.dot(q_in, w["wq"].T, precision=_HI) + w["bq"]
    k = jnp.dot(kv_in, w["wk"].T, precision=_HI) + w["bk"]
    v = jnp.dot(kv_in, w["wv"].T, precision=_HI) + w["bv"]
    q = q.reshape(B, Tq, num_heads, d_k).transpose(0, 2, 1, 3)
    k = k.reshape(B, Tk, num_heads, d_k).transpose(0, 2, 1, 3)
    v = v.reshape(B, Tk, num_heads, d_k).transpose(0, 2, 1, 3)
    s = jnp.einsum("bhqd,bhkd->bhqk", q, k, precision=_HI) / math.sqrt(d_k)
    s = jnp.where(mask[:, None, :, :] == 0, -NEG_INF, s)
    a = jax.nn.softmax(s, axis=-1)
    av = jnp.einsum("bhqk,bhkd->bhqd", a, v, precision=_HI)
    concat = av.transpose(0, 2, 1, 3).reshape(B, Tq, d_model)
    return jnp.dot(concat, w["w0"].T, precision=_HI) + w["b0"]


def decoder_layer_ref(x, e_output, e_mask, d_mask, p):
    x1 = _ref_layernorm(x, p["ln1_g"], p["ln1_b"])
    x = x + _ref_mha(x1, x1, d_mask, p["self_attn"])
    x2 = _ref_layernorm(x, p["ln2_g"], p["ln2_b"])
    x = x + _ref_mha(x2, e_output, e_mask, p["cross_attn"])
    x3 = _ref_layernorm(x, p["ln3_g"], p["ln3_b"])
    h = jax.nn.relu(jnp.dot(x3, p["ffn"]["w1"].T, precision=_HI) + p["ffn"]["b1"])
    x = x + jnp.dot(h, p["ffn"]["w2"].T, precision=_HI) + p["ffn"]["b2"]
    return x


# ----------------------------------- main --------------------------------------
if __name__ == "__main__":
    B, T, S = 2, 8, 8
    key = jax.random.PRNGKey(0)
    ks = iter(jax.random.split(key, 40))

    def rnd(shape, scl=0.1):
        return (scl * jax.random.normal(next(ks), shape)).astype(jnp.float32)

    # Inputs
    x = rnd((B, T, d_model), 1.0)
    e_output = rnd((B, S, d_model), 1.0)
    # e_mask: (B, 1, S) padding mask (1 = keep, 0 = masked)
    e_mask_np = np.ones((B, 1, S), dtype=np.float32)
    e_mask_np[1, 0, -2:] = 0.0
    e_mask = jnp.asarray(e_mask_np)
    # d_mask: (B, T, T) causal mask
    d_mask = jnp.broadcast_to(jnp.tril(jnp.ones((T, T), jnp.float32)), (B, T, T))

    # Parameters in PyTorch layout: Linear weight (out, in), bias (out,).
    def mha_p():
        return {"wq": rnd((d_model, d_model)), "bq": rnd((d_model,)),
                "wk": rnd((d_model, d_model)), "bk": rnd((d_model,)),
                "wv": rnd((d_model, d_model)), "bv": rnd((d_model,)),
                "w0": rnd((d_model, d_model)), "b0": rnd((d_model,))}

    params = {
        "ln1_g": 1.0 + rnd((d_model,)), "ln1_b": rnd((d_model,)),
        "ln2_g": 1.0 + rnd((d_model,)), "ln2_b": rnd((d_model,)),
        "ln3_g": 1.0 + rnd((d_model,)), "ln3_b": rnd((d_model,)),
        "self_attn": mha_p(),
        "cross_attn": mha_p(),
        "ffn": {"w1": rnd((d_ff, d_model)), "b1": rnd((d_ff,)),
                "w2": rnd((d_model, d_ff)), "b2": rnd((d_model,))},
    }

    # One-time packing / caching (reused across calls / decode steps).
    w_slab, vec_slab = pack_params(params, B, T, S)
    bias_slab = build_bias_slab(e_mask, d_mask, B, T, S)
    decoder_layer = make_decoder_layer(B, T, S)

    out = jax.block_until_ready(decoder_layer(x, e_output, bias_slab, w_slab, vec_slab))
    ref = jax.block_until_ready(decoder_layer_ref(x, e_output, e_mask, d_mask, params))

    # Tolerance accommodates MXU rounding and the approx-mode EUP reciprocal
    # used for the softmax denominator.
    np.testing.assert_allclose(np.asarray(out), np.asarray(ref),
                               rtol=5e-3, atol=5e-3)
    print("KERNEL_OK")
</pallas_src>

<mosaic_0001>
module attributes {stable_mosaic.version = 11 : i64} {
  func.func @kernel(%arg0: memref<32x32xf32, #tpu.memory_space<vmem>>, %arg1: memref<16x128xf32, #tpu.memory_space<vmem>>, %arg2: memref<448x128xf32, #tpu.memory_space<vmem>>, %arg3: memref<8x128xf32, #tpu.memory_space<vmem>>, %arg4: memref<16x32xf32, #tpu.memory_space<vmem>>) attributes {dimension_semantics = [], scalar_prefetch = 0 : i64, scratch_operands = 0 : i64, tpu.core_type = #tpu.core_type<tc>} {
    %c0 = arith.constant 0 : index
    %c0_0 = arith.constant 0 : index
    %0 = vector.load %arg0[%c0, %c0_0] : memref<32x32xf32, #tpu.memory_space<vmem>>, vector<16x32xf32>
    %c16 = arith.constant 16 : index
    %c0_1 = arith.constant 0 : index
    %1 = vector.load %arg0[%c16, %c0_1] : memref<32x32xf32, #tpu.memory_space<vmem>>, vector<16x32xf32>
    %c0_2 = arith.constant 0 : index
    %c0_3 = arith.constant 0 : index
    %2 = vector.load %arg1[%c0_2, %c0_3] : memref<16x128xf32, #tpu.memory_space<vmem>>, vector<16x128xf32>
    %3 = vector.extract_strided_slice %2 {offsets = [0, 0], sizes = [16, 64], strides = [1, 1]} : vector<16x128xf32> to vector<16x64xf32>
    %4 = vector.extract_strided_slice %2 {offsets = [0, 64], sizes = [16, 64], strides = [1, 1]} : vector<16x128xf32> to vector<16x64xf32>
    %c0_4 = arith.constant 0 : index
    %c0_5 = arith.constant 0 : index
    %5 = vector.load %arg3[%c0_4, %c0_5] : memref<8x128xf32, #tpu.memory_space<vmem>>, vector<8x128xf32>
    %6 = vector.extract_strided_slice %5 {offsets = [0, 0], sizes = [1, 96], strides = [1, 1]} : vector<8x128xf32> to vector<1x96xf32>
    %7 = vector.extract_strided_slice %5 {offsets = [1, 0], sizes = [1, 64], strides = [1, 1]} : vector<8x128xf32> to vector<1x64xf32>
    %8 = vector.extract_strided_slice %5 {offsets = [1, 64], sizes = [1, 64], strides = [1, 1]} : vector<8x128xf32> to vector<1x64xf32>
    %9 = vector.extract_strided_slice %5 {offsets = [2, 0], sizes = [1, 32], strides = [1, 1]} : vector<8x128xf32> to vector<1x32xf32>
    %10 = vector.extract_strided_slice %5 {offsets = [2, 32], sizes = [1, 32], strides = [1, 1]} : vector<8x128xf32> to vector<1x32xf32>
    %11 = vector.extract_strided_slice %5 {offsets = [2, 64], sizes = [1, 32], strides = [1, 1]} : vector<8x128xf32> to vector<1x32xf32>
    %12 = vector.extract_strided_slice %5 {offsets = [2, 96], sizes = [1, 32], strides = [1, 1]} : vector<8x128xf32> to vector<1x32xf32>
    %13 = vector.extract_strided_slice %5 {offsets = [3, 0], sizes = [1, 32], strides = [1, 1]} : vector<8x128xf32> to vector<1x32xf32>
    %14 = vector.extract_strided_slice %5 {offsets = [3, 32], sizes = [1, 32], strides = [1, 1]} : vector<8x128xf32> to vector<1x32xf32>
    %15 = vector.extract_strided_slice %5 {offsets = [3, 64], sizes = [1, 32], strides = [1, 1]} : vector<8x128xf32> to vector<1x32xf32>
    %16 = vector.extract_strided_slice %5 {offsets = [3, 96], sizes = [1, 32], strides = [1, 1]} : vector<8x128xf32> to vector<1x32xf32>
    %17 = vector.extract_strided_slice %5 {offsets = [4, 0], sizes = [1, 32], strides = [1, 1]} : vector<8x128xf32> to vector<1x32xf32>
    %18 = vector.extract_strided_slice %5 {offsets = [4, 32], sizes = [1, 32], strides = [1, 1]} : vector<8x128xf32> to vector<1x32xf32>
    %cst = arith.constant dense<0.000000e+00> : vector<16xf32>
    %19 = vector.multi_reduction <add>, %0, %cst [1] : vector<16x32xf32> to vector<16xf32>
    %20 = vector.shape_cast %19 : vector<16xf32> to vector<16x1xf32>
    %cst_6 = arith.constant 3.200000e+01 : f32
    %21 = vector.broadcast %cst_6 : f32 to vector<16x1xf32>
    %22 = arith.divf %20, %21 : vector<16x1xf32>
    %23 = arith.mulf %0, %0 : vector<16x32xf32>
    %cst_7 = arith.constant dense<0.000000e+00> : vector<16xf32>
    %24 = vector.multi_reduction <add>, %23, %cst_7 [1] : vector<16x32xf32> to vector<16xf32>
    %25 = vector.shape_cast %24 : vector<16xf32> to vector<16x1xf32>
    %cst_8 = arith.constant 3.200000e+01 : f32
    %26 = vector.broadcast %cst_8 : f32 to vector<16x1xf32>
    %27 = arith.divf %25, %26 : vector<16x1xf32>
    %28 = arith.mulf %22, %22 : vector<16x1xf32>
    %29 = arith.subf %27, %28 : vector<16x1xf32>
    %cst_9 = arith.constant 0.000000e+00 : f32
    %30 = vector.broadcast %cst_9 : f32 to vector<16x1xf32>
    %31 = arith.maximumf %29, %30 : vector<16x1xf32>
    %32 = vector.broadcast %22 : vector<16x1xf32> to vector<16x32xf32>
    %33 = arith.subf %0, %32 : vector<16x32xf32>
    %cst_10 = arith.constant 9.99999997E-7 : f32
    %34 = vector.broadcast %cst_10 : f32 to vector<16x1xf32>
    %35 = arith.addf %31, %34 : vector<16x1xf32>
    %36 = math.rsqrt %35 : vector<16x1xf32>
    %37 = vector.broadcast %36 : vector<16x1xf32> to vector<16x32xf32>
    %38 = arith.mulf %33, %37 : vector<16x32xf32>
    %39 = vector.broadcast %9 : vector<1x32xf32> to vector<16x32xf32>
    %40 = arith.mulf %38, %39 : vector<16x32xf32>
    %41 = vector.broadcast %10 : vector<1x32xf32> to vector<16x32xf32>
    %42 = arith.addf %40, %41 : vector<16x32xf32>
    %c0_11 = arith.constant 0 : index
    %c0_12 = arith.constant 0 : index
    %43 = vector.load %arg2[%c0_11, %c0_12] : memref<448x128xf32, #tpu.memory_space<vmem>>, vector<32x96xf32>
    %cst_13 = arith.constant dense<0.000000e+00> : vector<16x96xf32>
    %44 = tpu.matmul %42, %43, %cst_13 {dimension_numbers = #tpu.dot_dimension_numbers<[1], [0], [0], [1], [0, 0, 1, 1], [], []>} : vector<16x32xf32>, vector<32x96xf32>, vector<16x96xf32> -> vector<16x96xf32>
    %45 = vector.broadcast %6 : vector<1x96xf32> to vector<16x96xf32>
    %46 = arith.addf %44, %45 : vector<16x96xf32>
    %47 = vector.extract_strided_slice %46 {offsets = [0, 0], sizes = [16, 32], strides = [1, 1]} : vector<16x96xf32> to vector<16x32xf32>
    %48 = vector.extract_strided_slice %46 {offsets = [0, 32], sizes = [16, 32], strides = [1, 1]} : vector<16x96xf32> to vector<16x32xf32>
    %49 = vector.extract_strided_slice %46 {offsets = [0, 64], sizes = [16, 32], strides = [1, 1]} : vector<16x96xf32> to vector<16x32xf32>
    %c256 = arith.constant 256 : index
    %c0_14 = arith.constant 0 : index
    %50 = vector.load %arg2[%c256, %c0_14] : memref<448x128xf32, #tpu.memory_space<vmem>>, vector<32x64xf32>
    %c288 = arith.constant 288 : index
    %c0_15 = arith.constant 0 : index
    %51 = vector.load %arg2[%c288, %c0_15] : memref<448x128xf32, #tpu.memory_space<vmem>>, vector<64x32xf32>
    %52 = tpu.transpose %48, [1, 0] : vector<16x32xf32> -> vector<32x16xf32>
    %53 = tpu.concatenate %52, %52, %52, %52 in 1 : vector<32x16xf32>, vector<32x16xf32>, vector<32x16xf32>, vector<32x16xf32> -> vector<32x64xf32>
    %54 = arith.mulf %53, %50 : vector<32x64xf32>
    %cst_16 = arith.constant dense<0.000000e+00> : vector<16x64xf32>
    %55 = tpu.matmul %47, %54, %cst_16 {dimension_numbers = #tpu.dot_dimension_numbers<[1], [0], [0], [1], [0, 0, 1, 1], [], []>} : vector<16x32xf32>, vector<32x64xf32>, vector<16x64xf32> -> vector<16x64xf32>
    %56 = arith.addf %55, %3 : vector<16x64xf32>
    %cst_17 = arith.constant dense<0xFF800000> : vector<16xf32>
    %57 = vector.multi_reduction <maximumf>, %56, %cst_17 [1] : vector<16x64xf32> to vector<16xf32>
    %58 = vector.shape_cast %57 : vector<16xf32> to vector<16x1xf32>
    %59 = vector.broadcast %58 : vector<16x1xf32> to vector<16x64xf32>
    %60 = arith.subf %56, %59 : vector<16x64xf32>
    %61 = math.exp %60 : vector<16x64xf32>
    %62 = tpu.concatenate %49, %49, %49, %49 in 0 : vector<16x32xf32>, vector<16x32xf32>, vector<16x32xf32>, vector<16x32xf32> -> vector<64x32xf32>
    %63 = arith.mulf %62, %51 : vector<64x32xf32>
    %cst_18 = arith.constant dense<0.000000e+00> : vector<16x32xf32>
    %64 = tpu.matmul %61, %63, %cst_18 {dimension_numbers = #tpu.dot_dimension_numbers<[1], [0], [0], [1], [0, 0, 1, 1], [], []>} : vector<16x64xf32>, vector<64x32xf32>, vector<16x32xf32> -> vector<16x32xf32>
    %cst_19 = arith.constant dense<0.000000e+00> : vector<16x32xf32>
    %65 = tpu.matmul %61, %51, %cst_19 {dimension_numbers = #tpu.dot_dimension_numbers<[1], [0], [0], [1], [0, 0, 1, 1], [], []>} : vector<16x64xf32>, vector<64x32xf32>, vector<16x32xf32> -> vector<16x32xf32>
    %66 = tpu.reciprocal %65 {approx = true} : vector<16x32xf32> -> vector<16x32xf32>
    %67 = arith.mulf %64, %66 : vector<16x32xf32>
    %c32 = arith.constant 32 : index
    %c0_20 = arith.constant 0 : index
    %68 = vector.load %arg2[%c32, %c0_20] : memref<448x128xf32, #tpu.memory_space<vmem>>, vector<32x32xf32>
    %cst_21 = arith.constant dense<0.000000e+00> : vector<16x32xf32>
    %69 = tpu.matmul %67, %68, %cst_21 {dimension_numbers = #tpu.dot_dimension_numbers<[1], [0], [0], [1], [0, 0, 1, 1], [], []>} : vector<16x32xf32>, vector<32x32xf32>, vector<16x32xf32> -> vector<16x32xf32>
    %70 = arith.addf %0, %69 : vector<16x32xf32>
    %71 = vector.broadcast %15 : vector<1x32xf32> to vector<16x32xf32>
    %72 = arith.addf %70, %71 : vector<16x32xf32>
    %cst_22 = arith.constant dense<0.000000e+00> : vector<16xf32>
    %73 = vector.multi_reduction <add>, %72, %cst_22 [1] : vector<16x32xf32> to vector<16xf32>
    %74 = vector.shape_cast %73 : vector<16xf32> to vector<16x1xf32>
    %cst_23 = arith.constant 3.200000e+01 : f32
    %75 = vector.broadcast %cst_23 : f32 to vector<16x1xf32>
    %76 = arith.divf %74, %75 : vector<16x1xf32>
    %77 = arith.mulf %72, %72 : vector<16x32xf32>
    %cst_24 = arith.constant dense<0.000000e+00> : vector<16xf32>
    %78 = vector.multi_reduction <add>, %77, %cst_24 [1] : vector<16x32xf32> to vector<16xf32>
    %79 = vector.shape_cast %78 : vector<16xf32> to vector<16x1xf32>
    %cst_25 = arith.constant 3.200000e+01 : f32
    %80 = vector.broadcast %cst_25 : f32 to vector<16x1xf32>
    %81 = arith.divf %79, %80 : vector<16x1xf32>
    %82 = arith.mulf %76, %76 : vector<16x1xf32>
    %83 = arith.subf %81, %82 : vector<16x1xf32>
    %cst_26 = arith.constant 0.000000e+00 : f32
    %84 = vector.broadcast %cst_26 : f32 to vector<16x1xf32>
    %85 = arith.maximumf %83, %84 : vector<16x1xf32>
    %86 = vector.broadcast %76 : vector<16x1xf32> to vector<16x32xf32>
    %87 = arith.subf %72, %86 : vector<16x32xf32>
    %cst_27 = arith.constant 9.99999997E-7 : f32
    %88 = vector.broadcast %cst_27 : f32 to vector<16x1xf32>
    %89 = arith.addf %85, %88 : vector<16x1xf32>
    %90 = math.rsqrt %89 : vector<16x1xf32>
    %91 = vector.broadcast %90 : vector<16x1xf32> to vector<16x32xf32>
    %92 = arith.mulf %87, %91 : vector<16x32xf32>
    %93 = vector.broadcast %11 : vector<1x32xf32> to vector<16x32xf32>
    %94 = arith.mulf %92, %93 : vector<16x32xf32>
    %95 = vector.broadcast %12 : vector<1x32xf32> to vector<16x32xf32>
    %96 = arith.addf %94, %95 : vector<16x32xf32>
    %c96 = arith.constant 96 : index
    %c0_28 = arith.constant 0 : index
    %97 = vector.load %arg2[%c96, %c0_28] : memref<448x128xf32, #tpu.memory_space<vmem>>, vector<32x32xf32>
    %cst_29 = arith.constant dense<0.000000e+00> : vector<16x32xf32>
    %98 = tpu.matmul %96, %97, %cst_29 {dimension_numbers = #tpu.dot_dimension_numbers<[1], [0], [0], [1], [0, 0, 1, 1], [], []>} : vector<16x32xf32>, vector<32x32xf32>, vector<16x32xf32> -> vector<16x32xf32>
    %99 = vector.broadcast %18 : vector<1x32xf32> to vector<16x32xf32>
    %100 = arith.addf %98, %99 : vector<16x32xf32>
    %c128 = arith.constant 128 : index
    %c0_30 = arith.constant 0 : index
    %101 = vector.load %arg2[%c128, %c0_30] : memref<448x128xf32, #tpu.memory_space<vmem>>, vector<32x64xf32>
    %cst_31 = arith.constant dense<0.000000e+00> : vector<16x64xf32>
    %102 = tpu.matmul %1, %101, %cst_31 {dimension_numbers = #tpu.dot_dimension_numbers<[1], [0], [0], [1], [0, 0, 1, 1], [], []>} : vector<16x32xf32>, vector<32x64xf32>, vector<16x64xf32> -> vector<16x64xf32>
    %103 = vector.broadcast %7 : vector<1x64xf32> to vector<16x64xf32>
    %104 = arith.addf %102, %103 : vector<16x64xf32>
    %105 = vector.extract_strided_slice %104 {offsets = [0, 0], sizes = [16, 32], strides = [1, 1]} : vector<16x64xf32> to vector<16x32xf32>
    %106 = vector.extract_strided_slice %104 {offsets = [0, 32], sizes = [16, 32], strides = [1, 1]} : vector<16x64xf32> to vector<16x32xf32>
    %c352 = arith.constant 352 : index
    %c0_32 = arith.constant 0 : index
    %107 = vector.load %arg2[%c352, %c0_32] : memref<448x128xf32, #tpu.memory_space<vmem>>, vector<32x64xf32>
    %c384 = arith.constant 384 : index
    %c0_33 = arith.constant 0 : index
    %108 = vector.load %arg2[%c384, %c0_33] : memref<448x128xf32, #tpu.memory_space<vmem>>, vector<64x32xf32>
    %109 = tpu.transpose %105, [1, 0] : vector<16x32xf32> -> vector<32x16xf32>
    %110 = tpu.concatenate %109, %109, %109, %109 in 1 : vector<32x16xf32>, vector<32x16xf32>, vector<32x16xf32>, vector<32x16xf32> -> vector<32x64xf32>
    %111 = arith.mulf %110, %107 : vector<32x64xf32>
    %cst_34 = arith.constant dense<0.000000e+00> : vector<16x64xf32>
    %112 = tpu.matmul %100, %111, %cst_34 {dimension_numbers = #tpu.dot_dimension_numbers<[1], [0], [0], [1], [0, 0, 1, 1], [], []>} : vector<16x32xf32>, vector<32x64xf32>, vector<16x64xf32> -> vector<16x64xf32>
    %113 = arith.addf %112, %4 : vector<16x64xf32>
    %cst_35 = arith.constant dense<0xFF800000> : vector<16xf32>
    %114 = vector.multi_reduction <maximumf>, %113, %cst_35 [1] : vector<16x64xf32> to vector<16xf32>
    %115 = vector.shape_cast %114 : vector<16xf32> to vector<16x1xf32>
    %116 = vector.broadcast %115 : vector<16x1xf32> to vector<16x64xf32>
    %117 = arith.subf %113, %116 : vector<16x64xf32>
    %118 = math.exp %117 : vector<16x64xf32>
    %119 = tpu.concatenate %106, %106, %106, %106 in 0 : vector<16x32xf32>, vector<16x32xf32>, vector<16x32xf32>, vector<16x32xf32> -> vector<64x32xf32>
    %120 = arith.mulf %119, %108 : vector<64x32xf32>
    %cst_36 = arith.constant dense<0.000000e+00> : vector<16x32xf32>
    %121 = tpu.matmul %118, %120, %cst_36 {dimension_numbers = #tpu.dot_dimension_numbers<[1], [0], [0], [1], [0, 0, 1, 1], [], []>} : vector<16x64xf32>, vector<64x32xf32>, vector<16x32xf32> -> vector<16x32xf32>
    %cst_37 = arith.constant dense<0.000000e+00> : vector<16x32xf32>
    %122 = tpu.matmul %118, %108, %cst_37 {dimension_numbers = #tpu.dot_dimension_numbers<[1], [0], [0], [1], [0, 0, 1, 1], [], []>} : vector<16x64xf32>, vector<64x32xf32>, vector<16x32xf32> -> vector<16x32xf32>
    %123 = tpu.reciprocal %122 {approx = true} : vector<16x32xf32> -> vector<16x32xf32>
    %124 = arith.mulf %121, %123 : vector<16x32xf32>
    %c64 = arith.constant 64 : index
    %c0_38 = arith.constant 0 : index
    %125 = vector.load %arg2[%c64, %c0_38] : memref<448x128xf32, #tpu.memory_space<vmem>>, vector<32x32xf32>
    %cst_39 = arith.constant dense<0.000000e+00> : vector<16x32xf32>
    %126 = tpu.matmul %124, %125, %cst_39 {dimension_numbers = #tpu.dot_dimension_numbers<[1], [0], [0], [1], [0, 0, 1, 1], [], []>} : vector<16x32xf32>, vector<32x32xf32>, vector<16x32xf32> -> vector<16x32xf32>
    %127 = arith.addf %72, %126 : vector<16x32xf32>
    %128 = vector.broadcast %16 : vector<1x32xf32> to vector<16x32xf32>
    %129 = arith.addf %127, %128 : vector<16x32xf32>
    %cst_40 = arith.constant dense<0.000000e+00> : vector<16xf32>
    %130 = vector.multi_reduction <add>, %129, %cst_40 [1] : vector<16x32xf32> to vector<16xf32>
    %131 = vector.shape_cast %130 : vector<16xf32> to vector<16x1xf32>
    %cst_41 = arith.constant 3.200000e+01 : f32
    %132 = vector.broadcast %cst_41 : f32 to vector<16x1xf32>
    %133 = arith.divf %131, %132 : vector<16x1xf32>
    %134 = arith.mulf %129, %129 : vector<16x32xf32>
    %cst_42 = arith.constant dense<0.000000e+00> : vector<16xf32>
    %135 = vector.multi_reduction <add>, %134, %cst_42 [1] : vector<16x32xf32> to vector<16xf32>
    %136 = vector.shape_cast %135 : vector<16xf32> to vector<16x1xf32>
    %cst_43 = arith.constant 3.200000e+01 : f32
    %137 = vector.broadcast %cst_43 : f32 to vector<16x1xf32>
    %138 = arith.divf %136, %137 : vector<16x1xf32>
    %139 = arith.mulf %133, %133 : vector<16x1xf32>
    %140 = arith.subf %138, %139 : vector<16x1xf32>
    %cst_44 = arith.constant 0.000000e+00 : f32
    %141 = vector.broadcast %cst_44 : f32 to vector<16x1xf32>
    %142 = arith.maximumf %140, %141 : vector<16x1xf32>
    %143 = vector.broadcast %133 : vector<16x1xf32> to vector<16x32xf32>
    %144 = arith.subf %129, %143 : vector<16x32xf32>
    %cst_45 = arith.constant 9.99999997E-7 : f32
    %145 = vector.broadcast %cst_45 : f32 to vector<16x1xf32>
    %146 = arith.addf %142, %145 : vector<16x1xf32>
    %147 = math.rsqrt %146 : vector<16x1xf32>
    %148 = vector.broadcast %147 : vector<16x1xf32> to vector<16x32xf32>
    %149 = arith.mulf %144, %148 : vector<16x32xf32>
    %150 = vector.broadcast %13 : vector<1x32xf32> to vector<16x32xf32>
    %151 = arith.mulf %149, %150 : vector<16x32xf32>
    %152 = vector.broadcast %14 : vector<1x32xf32> to vector<16x32xf32>
    %153 = arith.addf %151, %152 : vector<16x32xf32>
    %c160 = arith.constant 160 : index
    %c0_46 = arith.constant 0 : index
    %154 = vector.load %arg2[%c160, %c0_46] : memref<448x128xf32, #tpu.memory_space<vmem>>, vector<32x64xf32>
    %cst_47 = arith.constant dense<0.000000e+00> : vector<16x64xf32>
    %155 = tpu.matmul %153, %154, %cst_47 {dimension_numbers = #tpu.dot_dimension_numbers<[1], [0], [0], [1], [0, 0, 1, 1], [], []>} : vector<16x32xf32>, vector<32x64xf32>, vector<16x64xf32> -> vector<16x64xf32>
    %156 = vector.broadcast %8 : vector<1x64xf32> to vector<16x64xf32>
    %157 = arith.addf %155, %156 : vector<16x64xf32>
    %cst_48 = arith.constant 0.000000e+00 : f32
    %158 = vector.broadcast %cst_48 : f32 to vector<16x64xf32>
    %159 = arith.maximumf %157, %158 : vector<16x64xf32>
    %c192 = arith.constant 192 : index
    %c0_49 = arith.constant 0 : index
    %160 = vector.load %arg2[%c192, %c0_49] : memref<448x128xf32, #tpu.memory_space<vmem>>, vector<64x32xf32>
    %cst_50 = arith.constant dense<0.000000e+00> : vector<16x32xf32>
    %161 = tpu.matmul %159, %160, %cst_50 {dimension_numbers = #tpu.dot_dimension_numbers<[1], [0], [0], [1], [0, 0, 1, 1], [], []>} : vector<16x64xf32>, vector<64x32xf32>, vector<16x32xf32> -> vector<16x32xf32>
    %162 = arith.addf %129, %161 : vector<16x32xf32>
    %163 = vector.broadcast %17 : vector<1x32xf32> to vector<16x32xf32>
    %164 = arith.addf %162, %163 : vector<16x32xf32>
    %c0_51 = arith.constant 0 : index
    %c0_52 = arith.constant 0 : index
    %165 = vector.load %arg4[%c0_51, %c0_52] : memref<16x32xf32, #tpu.memory_space<vmem>>, vector<16x32xf32>
    tpu.vector_store %arg4[%c0_51, %c0_52], %164 {strides = array<i32>} : memref<16x32xf32, #tpu.memory_space<vmem>>, vector<16x32xf32>,
    return
  }
}

</mosaic_0001>

<llo_original>
// kernel: run.1
$region0: #{run.1}
  #allocation0 [shape = 'u32[]', space=smem, size = 0x4, offset = 0x4, fixed_abs, tag = 'smem constant byte address 0x4 - core index']
  #allocation1 [shape = 'u32[72,128]{1,0:T(1,128)}', space=vmem, size = 0x9000, scoped, tag = 'internal scratch']
  %s0 = inlined_call_operand.vmem [shape: f32[32,32], index: 0, kind: input, shape index: {}]
  %s1 = inlined_call_operand.vmem [shape: f32[16,128], index: 1, kind: input, shape index: {}]
  %s2 = inlined_call_operand.hbm [shape: f32[448,128], index: 2, kind: input, shape index: {}]
  %s3 = inlined_call_operand.vmem [shape: f32[8,128], index: 3, kind: input, shape index: {}]
  %s4 = inlined_call_operand.hbm [shape: f32[16,32], index: 4, kind: output, shape index: {}]
  %s5 = sld [smem:[#allocation0]]
  $region30: #{run.1} parent=0
    _
  %s7 = ssub.s32 1, %s5
  %s8 = scalar_select 0, %s7, %s5
  $region1: #{run.1} parent=0
    #allocation2 [shape = 'u8[229376]{0}', space=vmem, size = 0x38000, scoped, tag = 'input window, operand 2, single buffered']
    #allocation3 [shape = 's32[1]{0}', space=sflag, size = 0x4, scoped, tag = 'scoped memory for run.1']
    #allocation4 [shape = 's32[1]{0}', space=sflag, size = 0x4, scoped, tag = 'scoped memory for run.1']
    #allocation5 [shape = 'u8[8192]{0}', space=vmem, size = 0x2000, scoped, tag = 'output window, operand 0, single buffered']
    %9 = vsyncpa [#allocation3], 0
    %10 = vsyncpa [#allocation4], 0
    // Predicated region
    $region2: #{run.1} parent=1 // pred_check
      _
    $region3: #{run.1} parent=1 // pred_check_branch
      %12 = sbr.rel (0) target = $region5
    $region4: #{run.1} parent=1 // pred_region
      _
    $region5: #{run.1} parent=1 // pred_fallthru
      _
    // Predicated region
    $region6: #{run.1} parent=1 // pred_check
      _
    $region7: #{run.1} parent=1 // pred_check_branch
      %14 = sbr.rel (0) target = $region9
    $region8: #{run.1} parent=1 // pred_region
      _
    $region9: #{run.1} parent=1 // pred_fallthru
      _
    // Predicated region
    $region10: #{run.1} parent=1 // pred_check
      _
    $region11: #{run.1} parent=1 // pred_check_branch
      %16 = sbr.rel (0) target = $region13
    $region12: #{run.1} parent=1 // pred_region
      %18 = vsyncadd [#allocation3], 0
      %s19 = sshll.u32 %s2, 4
      %s20 = int_to_ptr.hbm [resolvable:$true] %s19
      %s21 = sshll.u32 [#allocation2], 4
      %s22 = int_to_ptr.vmem [resolvable:$true] %s21
      %27 = dma.hbm_to_vmem [thread:$0]  %s20, 7168, %s22, [#allocation3], 128, 128, 8
    $region13: #{run.1} parent=1 // pred_fallthru
      _
    // Predicated region
    $region14: #{run.1} parent=1 // pred_check
      _
    $region15: #{run.1} parent=1 // pred_check_branch
      %29 = sbr.rel (0) target = $region17
    $region16: #{run.1} parent=1 // pred_region
      _
    $region17: #{run.1} parent=1 // pred_fallthru
      _
    // Predicated region
    $region18: #{run.1} parent=1 // pred_check
      _
    $region19: #{run.1} parent=1 // pred_check_branch
      %31 = sbr.rel (0) target = $region21
    $region20: #{run.1} parent=1 // pred_region
      %33 = dma.done [#allocation3], 7168
    $region21: #{run.1} parent=1 // pred_fallthru
      _
    %v34 = vld [vmem:[%s0] sm:$0xff]
    %v35 = vld [vmem:[%s0 + $0x8] sm:$0xff]
    %v36 = vld [vmem:[%s0 + $0x10] sm:$0xff]
    %v37 = vld [vmem:[%s0 + $0x18] sm:$0xff]
    %v38 = vld [vmem:[%s1] sm:$0xff]
    %v39 = vld [vmem:[%s1 + $0x8] sm:$0xff]
    %v40 = vld [vmem:[%s3] sm:$0xff]
    %vm41 = vcmask 261120
    %v42 = vsel %vm41, %v34, 0.0
    %43 = vadd.xlane.f32.xlu0 %v42
    %v44 = vpop.xlane.xlu0 %43
    %v45 = vsel %vm41, %v35, 0.0
    %46 = vadd.xlane.f32.xlu0 %v45
    %v47 = vpop.xlane.xlu0 %46
    %v48 = vrcp.pop 32.0
    %v49 = vmul.f32 32.0, %v48
    %v50 = vsub.f32 1.0, %v49
    %v51 = vmul.f32 %v48, %v50
    %v52 = vadd.f32 %v48, %v51
    %vm53 = vweird.f32 %v48
    %v54 = vsel %vm53, %v48, %v52
    %v55 = vmul.f32 %v44, %v54
    %v56 = vmul.f32 %v47, %v54
    %v57 = vmul.f32 %v34, %v34
    %v58 = vmul.f32 %v35, %v35
    %v59 = vsel %vm41, %v57, 0.0
    %60 = vadd.xlane.f32.xlu0 %v59
    %v61 = vpop.xlane.xlu0 %60
    %v62 = vsel %vm41, %v58, 0.0
    %63 = vadd.xlane.f32.xlu0 %v62
    %v64 = vpop.xlane.xlu0 %63
    %v65 = vmul.f32 %v61, %v54
    %v66 = vmul.f32 %v64, %v54
    %v67 = vmul.f32 %v55, %v55
    %v68 = vmul.f32 %v56, %v56
    %v69 = vsub.f32 %v65, %v67
    %v70 = vsub.f32 %v66, %v68
    %v71 = vmax.f32 %v69, 0.0
    %v72 = vmax.f32 %v70, 0.0
    %v73 = vsub.f32 %v34, %v55
    %v74 = vsub.f32 %v35, %v56
    %v75 = vadd.f32 %v71, 1e-06
    %v76 = vadd.f32 %v72, 1e-06
    %v77 = vrsqrt.pop %v75
    %v78 = vmul.f32 %v77, %v75
    %v79 = vmul.f32 %v78, %v77
    %v80 = vmul.f32 0.5, %v79
    %v81 = vsub.f32 1.5, %v80
    %v82 = vmul.f32 %v77, %v81
    %vm83 = vweird.f32 %v75
    %vm84 = vweird.f32 %v77
    %vm85 = vmor %vm83, %vm84
    %v86 = vsel %vm85, %v77, %v82
    %v87 = vrsqrt.pop %v76
    %v88 = vmul.f32 %v87, %v76
    %v89 = vmul.f32 %v88, %v87
    %v90 = vmul.f32 0.5, %v89
    %v91 = vsub.f32 1.5, %v90
    %v92 = vmul.f32 %v87, %v91
    %vm93 = vweird.f32 %v76
    %vm94 = vweird.f32 %v87
    %vm95 = vmor %vm93, %vm94
    %v96 = vsel %vm95, %v87, %v92
    %v97 = vmul.f32 %v73, %v86
    %v98 = vmul.f32 %v74, %v96
    %v99 = vperm.slane %v40, 2
    %v100 = vmul.f32 %v97, %v99
    %v101 = vmul.f32 %v98, %v99
    %103 = vrot.lane.b32.xlu0 %v99, 96
    %v104 = vpop.permute.xlu0 %103
    %v106 = vadd.f32 %v100, %v104
    %v107 = vadd.f32 %v101, %v104
    %v108 = vld [vmem:[#allocation2] sm:$0xff]
    %v109 = vld [vmem:[#allocation2 + $0x8] sm:$0xff]
    %v110 = vld [vmem:[#allocation2 + $0x10] sm:$0xff]
    %v111 = vld [vmem:[#allocation2 + $0x18] sm:$0xff]
    %v112 = vperm.slane %v40, 0
    %v114 = vsel %vm41, %v106, 0
    %v117 = vsel %vm41, %v107, 0
    %119 = vmatpush.msra.mxu0 0.0
    %120 = vmatpush.msra.mxu0 0.0
    %121 = vmatpush.msra.mxu0 0.0
    %122 = vmatpush.msra.mxu0 0.0
    %123 = vmatpush.msra.mxu0 0.0
    %124 = vmatpush.msra.mxu0 0.0
    %125 = vmatpush.msra.mxu0 0.0
    %126 = vmatpush.msra.mxu0 0.0
    %127 = vmatpush.msra.mxu0 0.0
    %128 = vmatpush.msra.mxu0 0.0
    %129 = vmatpush.msra.mxu0 0.0
    %130 = vmatpush.msra.mxu0 0.0
    %131 = vmatpush.msra.mxu0 %v111
    %132 = vmatpush.msra.mxu0 %v110
    %133 = vmatpush.msra.mxu0 %v109
    %134 = vmatpush.msra.mxu0 %v108
    %135 = vmatmul.f32.gmra.mxu0 %v114
    %v136 = vpop.f32.mrf.mxu0
    %v137 = vadd.f32 %v112, %v136
    %138 = vmatmul.f32.gmra.mxu0 %v117
    %v139 = vpop.f32.mrf.mxu0
    %v140 = vadd.f32 %v112, %v139
    %141 = vdwg.mxu0
    %v142 = vld [vmem:[#allocation2 + $0x100] sm:$0xff]
    %v143 = vld [vmem:[#allocation2 + $0x108] sm:$0xff]
    %v144 = vld [vmem:[#allocation2 + $0x110] sm:$0xff]
    %v145 = vld [vmem:[#allocation2 + $0x118] sm:$0xff]
    %v146 = vld [vmem:[#allocation2 + $0x120] sm:$0xff]
    %v147 = vld [vmem:[#allocation2 + $0x128] sm:$0xff]
    %v148 = vld [vmem:[#allocation2 + $0x130] sm:$0xff]
    %v149 = vld [vmem:[#allocation2 + $0x138] sm:$0xff]
    %v150 = vld [vmem:[#allocation2 + $0x140] sm:$0xff]
    %v151 = vld [vmem:[#allocation2 + $0x148] sm:$0xff]
    %v152 = vld [vmem:[#allocation2 + $0x150] sm:$0xff]
    %v153 = vld [vmem:[#allocation2 + $0x158] sm:$0xff]
    %156 = vrot.lane.b32.xlu0 %v137, 96
    %v157 = vpop.permute.xlu0 %156
    %158 = vrot.lane.b32.xlu0 %v140, 96
    %v159 = vpop.permute.xlu0 %158
    %162 = vxpose.xlu0.b32.start [1/16] %v157, 128
    %163 = vxpose.xlu0.b32.cont [2/16] %v159, 128
    %164 = vxpose.xlu0.b32.cont [3/16] 0.0, 128
    %165 = vxpose.xlu0.b32.cont [4/16] 0.0, 128
    %166 = vxpose.xlu0.b32.cont [5/16] 0.0, 128
    %167 = vxpose.xlu0.b32.cont [6/16] 0.0, 128
    %168 = vxpose.xlu0.b32.cont [7/16] 0.0, 128
    %169 = vxpose.xlu0.b32.cont [8/16] 0.0, 128
    %170 = vxpose.xlu0.b32.cont [9/16] 0.0, 128
    %171 = vxpose.xlu0.b32.cont [10/16] 0.0, 128
    %172 = vxpose.xlu0.b32.cont [11/16] 0.0, 128
    %173 = vxpose.xlu0.b32.cont [12/16] 0.0, 128
    %174 = vxpose.xlu0.b32.cont [13/16] 0.0, 128
    %175 = vxpose.xlu0.b32.cont [14/16] 0.0, 128
    %176 = vxpose.xlu0.b32.cont [15/16] 0.0, 128
    %177 = vxpose.xlu0.b32.end [16/16] 0.0, 128
    %v178 = vpop.trf.xlu0
    %v179 = vpop.trf.xlu0
    %v180 = vpop.trf.xlu0
    %v181 = vpop.trf.xlu0
    %v182 = vpop.trf.xlu0
    %v183 = vpop.trf.xlu0
    %v184 = vpop.trf.xlu0
    %v185 = vpop.trf.xlu0
    %v186 = vpop.trf.xlu0
    %v187 = vpop.trf.xlu0
    %v188 = vpop.trf.xlu0
    %v189 = vpop.trf.xlu0
    %v190 = vpop.trf.xlu0
    %v191 = vpop.trf.xlu0
    %v192 = vpop.trf.xlu0
    %v193 = vpop.trf.xlu0
    %198 = vrot.lane.b32.xlu0 %v178, 16
    %v199 = vpop.permute.xlu0 %198
    %200 = vrot.lane.b32.xlu0 %v179, 16
    %v201 = vpop.permute.xlu0 %200
    %202 = vrot.lane.b32.xlu0 %v180, 16
    %v203 = vpop.permute.xlu0 %202
    %204 = vrot.lane.b32.xlu0 %v181, 16
    %v205 = vpop.permute.xlu0 %204
    %210 = vrot.lane.b32.xlu0 %v178, 32
    %v211 = vpop.permute.xlu0 %210
    %212 = vrot.lane.b32.xlu0 %v179, 32
    %v213 = vpop.permute.xlu0 %212
    %214 = vrot.lane.b32.xlu0 %v180, 32
    %v215 = vpop.permute.xlu0 %214
    %216 = vrot.lane.b32.xlu0 %v181, 32
    %v217 = vpop.permute.xlu0 %216
    %222 = vrot.lane.b32.xlu0 %v178, 48
    %v223 = vpop.permute.xlu0 %222
    %224 = vrot.lane.b32.xlu0 %v179, 48
    %v225 = vpop.permute.xlu0 %224
    %226 = vrot.lane.b32.xlu0 %v180, 48
    %v227 = vpop.permute.xlu0 %226
    %228 = vrot.lane.b32.xlu0 %v181, 48
    %v229 = vpop.permute.xlu0 %228
    %vm234 = vcmask 130048
    %v235 = vsel %vm234, %v178, %v199
    %v236 = vsel %vm234, %v179, %v201
    %v237 = vsel %vm234, %v180, %v203
    %v238 = vsel %vm234, %v181, %v205
    %v239 = vsel %vm41, %v235, %v211
    %v240 = vsel %vm41, %v236, %v213
    %v241 = vsel %vm41, %v237, %v215
    %v242 = vsel %vm41, %v238, %v217
    %vm243 = vcmask 392192
    %v244 = vsel %vm243, %v239, %v223
    %v245 = vsel %vm243, %v240, %v225
    %v246 = vsel %vm243, %v241, %v227
    %v247 = vsel %vm243, %v242, %v229
    %v248 = vmul.f32 %v244, %v142
    %v249 = vmul.f32 %v245, %v143
    %v250 = vmul.f32 %v246, %v144
    %v251 = vmul.f32 %v247, %v145
    %v252 = vsel %vm41, %v137, 0
    %v254 = vsel %vm41, %v140, 0
    %256 = vmatpush.msra.mxu0 0.0
    %257 = vmatpush.msra.mxu0 0.0
    %258 = vmatpush.msra.mxu0 0.0
    %259 = vmatpush.msra.mxu0 0.0
    %260 = vmatpush.msra.mxu0 0.0
    %261 = vmatpush.msra.mxu0 0.0
    %262 = vmatpush.msra.mxu0 0.0
    %263 = vmatpush.msra.mxu0 0.0
    %264 = vmatpush.msra.mxu0 0.0
    %265 = vmatpush.msra.mxu0 0.0
    %266 = vmatpush.msra.mxu0 0.0
    %267 = vmatpush.msra.mxu0 0.0
    %268 = vmatpush.msra.mxu0 %v251
    %269 = vmatpush.msra.mxu0 %v250
    %270 = vmatpush.msra.mxu0 %v249
    %271 = vmatpush.msra.mxu0 %v248
    %272 = vmatmul.f32.gmra.mxu0 %v252
    %v273 = vpop.f32.mrf.mxu0
    %v274 = vadd.f32 %v38, %v273
    %275 = vmatmul.f32.gmra.mxu0 %v254
    %v276 = vpop.f32.mrf.mxu0
    %v277 = vadd.f32 %v39, %v276
    %278 = vdwg.mxu0
    %vm279 = vcmask 523264
    %v280 = vsel %vm279, %v274, -inf
    %281 = vmax.xlane.f32.xlu0 %v280
    %v282 = vpop.xlane.xlu0 %281
    %v283 = vsel %vm279, %v277, -inf
    %284 = vmax.xlane.f32.xlu0 %v283
    %v285 = vpop.xlane.xlu0 %284
    %v286 = vsub.f32 %v274, %v282
    %v287 = vsub.f32 %v277, %v285
    %v288 = vmul.f32 %v286, 1.442695
    %v289 = vpow.pop %v288
    %v290 = vmul.f32 %v287, 1.442695
    %v291 = vpow.pop %v290
    %300 = vrot.lane.b32.xlu0 %v146, 64
    %v301 = vpop.permute.xlu0 %300
    %302 = vrot.lane.b32.xlu0 %v147, 64
    %v303 = vpop.permute.xlu0 %302
    %304 = vrot.lane.b32.xlu0 %v148, 64
    %v305 = vpop.permute.xlu0 %304
    %306 = vrot.lane.b32.xlu0 %v149, 64
    %v307 = vpop.permute.xlu0 %306
    %308 = vrot.lane.b32.xlu0 %v150, 64
    %v309 = vpop.permute.xlu0 %308
    %310 = vrot.lane.b32.xlu0 %v151, 64
    %v311 = vpop.permute.xlu0 %310
    %312 = vrot.lane.b32.xlu0 %v152, 64
    %v313 = vpop.permute.xlu0 %312
    %314 = vrot.lane.b32.xlu0 %v153, 64
    %v315 = vpop.permute.xlu0 %314
    %v324 = vmul.f32 %v137, %v301
    %v325 = vmul.f32 %v140, %v303
    %v326 = vmul.f32 %v137, %v305
    %v327 = vmul.f32 %v140, %v307
    %v328 = vmul.f32 %v137, %v309
    %v329 = vmul.f32 %v140, %v311
    %v330 = vmul.f32 %v137, %v313
    %v331 = vmul.f32 %v140, %v315
    %340 = vrot.lane.b32.xlu0 %v324, 64
    %v341 = vpop.permute.xlu0 %340
    %342 = vrot.lane.b32.xlu0 %v325, 64
    %v343 = vpop.permute.xlu0 %342
    %344 = vrot.lane.b32.xlu0 %v326, 64
    %v345 = vpop.permute.xlu0 %344
    %346 = vrot.lane.b32.xlu0 %v327, 64
    %v347 = vpop.permute.xlu0 %346
    %348 = vrot.lane.b32.xlu0 %v328, 64
    %v349 = vpop.permute.xlu0 %348
    %350 = vrot.lane.b32.xlu0 %v329, 64
    %v351 = vpop.permute.xlu0 %350
    %352 = vrot.lane.b32.xlu0 %v330, 64
    %v353 = vpop.permute.xlu0 %352
    %354 = vrot.lane.b32.xlu0 %v331, 64
    %v355 = vpop.permute.xlu0 %354
    %v365 = vsel %vm279, %v289, 0
    %v368 = vsel %vm279, %v291, 0
    %370 = vmatpush.msra.mxu0 0.0
    %371 = vmatpush.msra.mxu0 0.0
    %372 = vmatpush.msra.mxu0 0.0
    %373 = vmatpush.msra.mxu0 0.0
    %374 = vmatpush.msra.mxu0 0.0
    %375 = vmatpush.msra.mxu0 0.0
    %376 = vmatpush.msra.mxu0 0.0
    %377 = vmatpush.msra.mxu0 0.0
    %378 = vmatpush.msra.mxu0 %v355
    %379 = vmatpush.msra.mxu0 %v353
    %380 = vmatpush.msra.mxu0 %v351
    %381 = vmatpush.msra.mxu0 %v349
    %382 = vmatpush.msra.mxu0 %v347
    %383 = vmatpush.msra.mxu0 %v345
    %384 = vmatpush.msra.mxu0 %v343
    %385 = vmatpush.msra.mxu0 %v341
    %386 = vmatmul.f32.gmra.mxu0 %v365
    %v387 = vpop.f32.mrf.mxu0
    %v388 = vadd.f32 0.0, %v387
    %389 = vmatmul.f32.gmra.mxu0 %v368
    %v390 = vpop.f32.mrf.mxu0
    %v391 = vadd.f32 0.0, %v390
    %392 = vdwg.mxu0
    %393 = vmatpush.msra.mxu0 0.0
    %394 = vmatpush.msra.mxu0 0.0
    %395 = vmatpush.msra.mxu0 0.0
    %396 = vmatpush.msra.mxu0 0.0
    %397 = vmatpush.msra.mxu0 0.0
    %398 = vmatpush.msra.mxu0 0.0
    %399 = vmatpush.msra.mxu0 0.0
    %400 = vmatpush.msra.mxu0 0.0
    %401 = vmatpush.msra.mxu0 %v153
    %402 = vmatpush.msra.mxu0 %v152
    %403 = vmatpush.msra.mxu0 %v151
    %404 = vmatpush.msra.mxu0 %v150
    %405 = vmatpush.msra.mxu0 %v149
    %406 = vmatpush.msra.mxu0 %v148
    %407 = vmatpush.msra.mxu0 %v147
    %408 = vmatpush.msra.mxu0 %v146
    %409 = vmatmul.f32.gmra.mxu0 %v365
    %v410 = vpop.f32.mrf.mxu0
    %v411 = vadd.f32 0.0, %v410
    %412 = vmatmul.f32.gmra.mxu0 %v368
    %v413 = vpop.f32.mrf.mxu0
    %v414 = vadd.f32 0.0, %v413
    %415 = vdwg.mxu0
    %v416 = vrcp.pop %v411
    %v417 = vrcp.pop %v414
    %v418 = vmul.f32 %v388, %v416
    %v419 = vmul.f32 %v391, %v417
    %v420 = vld [vmem:[#allocation2 + $0x20] sm:$0xff]
    %v421 = vld [vmem:[#allocation2 + $0x28] sm:$0xff]
    %v422 = vld [vmem:[#allocation2 + $0x30] sm:$0xff]
    %v423 = vld [vmem:[#allocation2 + $0x38] sm:$0xff]
    %v425 = vsel %vm41, %v418, 0
    %v428 = vsel %vm41, %v419, 0
    %430 = vmatpush.msra.mxu0 0.0
    %431 = vmatpush.msra.mxu0 0.0
    %432 = vmatpush.msra.mxu0 0.0
    %433 = vmatpush.msra.mxu0 0.0
    %434 = vmatpush.msra.mxu0 0.0
    %435 = vmatpush.msra.mxu0 0.0
    %436 = vmatpush.msra.mxu0 0.0
    %437 = vmatpush.msra.mxu0 0.0
    %438 = vmatpush.msra.mxu0 0.0
    %439 = vmatpush.msra.mxu0 0.0
    %440 = vmatpush.msra.mxu0 0.0
    %441 = vmatpush.msra.mxu0 0.0
    %442 = vmatpush.msra.mxu0 %v423
    %443 = vmatpush.msra.mxu0 %v422
    %444 = vmatpush.msra.mxu0 %v421
    %445 = vmatpush.msra.mxu0 %v420
    %446 = vmatmul.f32.gmra.mxu0 %v425
    %v447 = vpop.f32.mrf.mxu0
    %v448 = vadd.f32 0.0, %v447
    %449 = vmatmul.f32.gmra.mxu0 %v428
    %v450 = vpop.f32.mrf.mxu0
    %v451 = vadd.f32 0.0, %v450
    %452 = vdwg.mxu0
    %v453 = vadd.f32 %v34, %v448
    %v454 = vadd.f32 %v35, %v451
    %v455 = vperm.slane %v40, 3
    %457 = vrot.lane.b32.xlu0 %v455, 64
    %v458 = vpop.permute.xlu0 %457
    %v460 = vadd.f32 %v453, %v458
    %v461 = vadd.f32 %v454, %v458
    %v462 = vsel %vm41, %v460, 0.0
    %463 = vadd.xlane.f32.xlu0 %v462
    %v464 = vpop.xlane.xlu0 %463
    %v465 = vsel %vm41, %v461, 0.0
    %466 = vadd.xlane.f32.xlu0 %v465
    %v467 = vpop.xlane.xlu0 %466
    %v468 = vmul.f32 %v464, %v54
    %v469 = vmul.f32 %v467, %v54
    %v470 = vmul.f32 %v460, %v460
    %v471 = vmul.f32 %v461, %v461
    %v472 = vsel %vm41, %v470, 0.0
    %473 = vadd.xlane.f32.xlu0 %v472
    %v474 = vpop.xlane.xlu0 %473
    %v475 = vsel %vm41, %v471, 0.0
    %476 = vadd.xlane.f32.xlu0 %v475
    %v477 = vpop.xlane.xlu0 %476
    %v478 = vmul.f32 %v474, %v54
    %v479 = vmul.f32 %v477, %v54
    %v480 = vmul.f32 %v468, %v468
    %v481 = vmul.f32 %v469, %v469
    %v482 = vsub.f32 %v478, %v480
    %v483 = vsub.f32 %v479, %v481
    %v484 = vmax.f32 %v482, 0.0
    %v485 = vmax.f32 %v483, 0.0
    %v486 = vsub.f32 %v460, %v468
    %v487 = vsub.f32 %v461, %v469
    %v488 = vadd.f32 %v484, 1e-06
    %v489 = vadd.f32 %v485, 1e-06
    %v490 = vrsqrt.pop %v488
    %v491 = vmul.f32 %v490, %v488
    %v492 = vmul.f32 %v491, %v490
    %v493 = vmul.f32 0.5, %v492
    %v494 = vsub.f32 1.5, %v493
    %v495 = vmul.f32 %v490, %v494
    %vm496 = vweird.f32 %v488
    %vm497 = vweird.f32 %v490
    %vm498 = vmor %vm496, %vm497
    %v499 = vsel %vm498, %v490, %v495
    %v500 = vrsqrt.pop %v489
    %v501 = vmul.f32 %v500, %v489
    %v502 = vmul.f32 %v501, %v500
    %v503 = vmul.f32 0.5, %v502
    %v504 = vsub.f32 1.5, %v503
    %v505 = vmul.f32 %v500, %v504
    %vm506 = vweird.f32 %v489
    %vm507 = vweird.f32 %v500
    %vm508 = vmor %vm506, %vm507
    %v509 = vsel %vm508, %v500, %v505
    %v510 = vmul.f32 %v486, %v499
    %v511 = vmul.f32 %v487, %v509
    %512 = vrot.lane.b32.xlu0 %v99, 64
    %v513 = vpop.permute.xlu0 %512
    %v515 = vmul.f32 %v510, %v513
    %v516 = vmul.f32 %v511, %v513
    %517 = vrot.lane.b32.xlu0 %v99, 32
    %v518 = vpop.permute.xlu0 %517
    %v520 = vadd.f32 %v515, %v518
    %v521 = vadd.f32 %v516, %v518
    %v522 = vld [vmem:[#allocation2 + $0x60] sm:$0xff]
    %v523 = vld [vmem:[#allocation2 + $0x68] sm:$0xff]
    %v524 = vld [vmem:[#allocation2 + $0x70] sm:$0xff]
    %v525 = vld [vmem:[#allocation2 + $0x78] sm:$0xff]
    %v526 = vperm.slane %v40, 4
    %528 = vrot.lane.b32.xlu0 %v526, 96
    %v529 = vpop.permute.xlu0 %528
    %v532 = vsel %vm41, %v520, 0
    %v535 = vsel %vm41, %v521, 0
    %537 = vmatpush.msra.mxu0 0.0
    %538 = vmatpush.msra.mxu0 0.0
    %539 = vmatpush.msra.mxu0 0.0
    %540 = vmatpush.msra.mxu0 0.0
    %541 = vmatpush.msra.mxu0 0.0
    %542 = vmatpush.msra.mxu0 0.0
    %543 = vmatpush.msra.mxu0 0.0
    %544 = vmatpush.msra.mxu0 0.0
    %545 = vmatpush.msra.mxu0 0.0
    %546 = vmatpush.msra.mxu0 0.0
    %547 = vmatpush.msra.mxu0 0.0
    %548 = vmatpush.msra.mxu0 0.0
    %549 = vmatpush.msra.mxu0 %v525
    %550 = vmatpush.msra.mxu0 %v524
    %551 = vmatpush.msra.mxu0 %v523
    %552 = vmatpush.msra.mxu0 %v522
    %553 = vmatmul.f32.gmra.mxu0 %v532
    %v554 = vpop.f32.mrf.mxu0
    %v555 = vadd.f32 %v529, %v554
    %556 = vmatmul.f32.gmra.mxu0 %v535
    %v557 = vpop.f32.mrf.mxu0
    %v558 = vadd.f32 %v529, %v557
    %559 = vdwg.mxu0
    %v560 = vld [vmem:[#allocation2 + $0x80] sm:$0xff]
    %v561 = vld [vmem:[#allocation2 + $0x88] sm:$0xff]
    %v562 = vld [vmem:[#allocation2 + $0x90] sm:$0xff]
    %v563 = vld [vmem:[#allocation2 + $0x98] sm:$0xff]
    %v564 = vperm.slane %v40, 1
    %v566 = vsel %vm41, %v36, 0
    %v569 = vsel %vm41, %v37, 0
    %571 = vmatpush.msra.mxu0 0.0
    %572 = vmatpush.msra.mxu0 0.0
    %573 = vmatpush.msra.mxu0 0.0
    %574 = vmatpush.msra.mxu0 0.0
    %575 = vmatpush.msra.mxu0 0.0
    %576 = vmatpush.msra.mxu0 0.0
    %577 = vmatpush.msra.mxu0 0.0
    %578 = vmatpush.msra.mxu0 0.0
    %579 = vmatpush.msra.mxu0 0.0
    %580 = vmatpush.msra.mxu0 0.0
    %581 = vmatpush.msra.mxu0 0.0
    %582 = vmatpush.msra.mxu0 0.0
    %583 = vmatpush.msra.mxu0 %v563
    %584 = vmatpush.msra.mxu0 %v562
    %585 = vmatpush.msra.mxu0 %v561
    %586 = vmatpush.msra.mxu0 %v560
    %587 = vmatmul.f32.gmra.mxu0 %v566
    %v588 = vpop.f32.mrf.mxu0
    %v589 = vadd.f32 %v564, %v588
    %590 = vmatmul.f32.gmra.mxu0 %v569
    %v591 = vpop.f32.mrf.mxu0
    %v592 = vadd.f32 %v564, %v591
    %593 = vdwg.mxu0
    %v594 = vld [vmem:[#allocation2 + $0x160] sm:$0xff]
    %v595 = vld [vmem:[#allocation2 + $0x168] sm:$0xff]
    %v596 = vld [vmem:[#allocation2 + $0x170] sm:$0xff]
    %v597 = vld [vmem:[#allocation2 + $0x178] sm:$0xff]
    %v598 = vld [vmem:[#allocation2 + $0x180] sm:$0xff]
    %v599 = vld [vmem:[#allocation2 + $0x188] sm:$0xff]
    %v600 = vld [vmem:[#allocation2 + $0x190] sm:$0xff]
    %v601 = vld [vmem:[#allocation2 + $0x198] sm:$0xff]
    %v602 = vld [vmem:[#allocation2 + $0x1a0] sm:$0xff]
    %v603 = vld [vmem:[#allocation2 + $0x1a8] sm:$0xff]
    %v604 = vld [vmem:[#allocation2 + $0x1b0] sm:$0xff]
    %v605 = vld [vmem:[#allocation2 + $0x1b8] sm:$0xff]
    %606 = vxpose.xlu0.b32.start [1/16] %v589, 128
    %607 = vxpose.xlu0.b32.cont [2/16] %v592, 128
    %608 = vxpose.xlu0.b32.cont [3/16] 0.0, 128
    %609 = vxpose.xlu0.b32.cont [4/16] 0.0, 128
    %610 = vxpose.xlu0.b32.cont [5/16] 0.0, 128
    %611 = vxpose.xlu0.b32.cont [6/16] 0.0, 128
    %612 = vxpose.xlu0.b32.cont [7/16] 0.0, 128
    %613 = vxpose.xlu0.b32.cont [8/16] 0.0, 128
    %614 = vxpose.xlu0.b32.cont [9/16] 0.0, 128
    %615 = vxpose.xlu0.b32.cont [10/16] 0.0, 128
    %616 = vxpose.xlu0.b32.cont [11/16] 0.0, 128
    %617 = vxpose.xlu0.b32.cont [12/16] 0.0, 128
    %618 = vxpose.xlu0.b32.cont [13/16] 0.0, 128
    %619 = vxpose.xlu0.b32.cont [14/16] 0.0, 128
    %620 = vxpose.xlu0.b32.cont [15/16] 0.0, 128
    %621 = vxpose.xlu0.b32.end [16/16] 0.0, 128
    %v622 = vpop.trf.xlu0
    %v623 = vpop.trf.xlu0
    %v624 = vpop.trf.xlu0
    %v625 = vpop.trf.xlu0
    %v626 = vpop.trf.xlu0
    %v627 = vpop.trf.xlu0
    %v628 = vpop.trf.xlu0
    %v629 = vpop.trf.xlu0
    %v630 = vpop.trf.xlu0
    %v631 = vpop.trf.xlu0
    %v632 = vpop.trf.xlu0
    %v633 = vpop.trf.xlu0
    %v634 = vpop.trf.xlu0
    %v635 = vpop.trf.xlu0
    %v636 = vpop.trf.xlu0
    %v637 = vpop.trf.xlu0
    %642 = vrot.lane.b32.xlu0 %v622, 16
    %v643 = vpop.permute.xlu0 %642
    %644 = vrot.lane.b32.xlu0 %v623, 16
    %v645 = vpop.permute.xlu0 %644
    %646 = vrot.lane.b32.xlu0 %v624, 16
    %v647 = vpop.permute.xlu0 %646
    %648 = vrot.lane.b32.xlu0 %v625, 16
    %v649 = vpop.permute.xlu0 %648
    %654 = vrot.lane.b32.xlu0 %v622, 32
    %v655 = vpop.permute.xlu0 %654
    %656 = vrot.lane.b32.xlu0 %v623, 32
    %v657 = vpop.permute.xlu0 %656
    %658 = vrot.lane.b32.xlu0 %v624, 32
    %v659 = vpop.permute.xlu0 %658
    %660 = vrot.lane.b32.xlu0 %v625, 32
    %v661 = vpop.permute.xlu0 %660
    %666 = vrot.lane.b32.xlu0 %v622, 48
    %v667 = vpop.permute.xlu0 %666
    %668 = vrot.lane.b32.xlu0 %v623, 48
    %v669 = vpop.permute.xlu0 %668
    %670 = vrot.lane.b32.xlu0 %v624, 48
    %v671 = vpop.permute.xlu0 %670
    %672 = vrot.lane.b32.xlu0 %v625, 48
    %v673 = vpop.permute.xlu0 %672
    %v678 = vsel %vm234, %v622, %v643
    %v679 = vsel %vm234, %v623, %v645
    %v680 = vsel %vm234, %v624, %v647
    %v681 = vsel %vm234, %v625, %v649
    %v682 = vsel %vm41, %v678, %v655
    %v683 = vsel %vm41, %v679, %v657
    %v684 = vsel %vm41, %v680, %v659
    %v685 = vsel %vm41, %v681, %v661
    %v686 = vsel %vm243, %v682, %v667
    %v687 = vsel %vm243, %v683, %v669
    %v688 = vsel %vm243, %v684, %v671
    %v689 = vsel %vm243, %v685, %v673
    %v690 = vmul.f32 %v686, %v594
    %v691 = vmul.f32 %v687, %v595
    %v692 = vmul.f32 %v688, %v596
    %v693 = vmul.f32 %v689, %v597
    %696 = vrot.lane.b32.xlu0 %v38, 64
    %v697 = vpop.permute.xlu0 %696
    %698 = vrot.lane.b32.xlu0 %v39, 64
    %v699 = vpop.permute.xlu0 %698
    %v703 = vsel %vm41, %v555, 0
    %v706 = vsel %vm41, %v558, 0
    %708 = vmatpush.msra.mxu0 0.0
    %709 = vmatpush.msra.mxu0 0.0
    %710 = vmatpush.msra.mxu0 0.0
    %711 = vmatpush.msra.mxu0 0.0
    %712 = vmatpush.msra.mxu0 0.0
    %713 = vmatpush.msra.mxu0 0.0
    %714 = vmatpush.msra.mxu0 0.0
    %715 = vmatpush.msra.mxu0 0.0
    %716 = vmatpush.msra.mxu0 0.0
    %717 = vmatpush.msra.mxu0 0.0
    %718 = vmatpush.msra.mxu0 0.0
    %719 = vmatpush.msra.mxu0 0.0
    %720 = vmatpush.msra.mxu0 %v693
    %721 = vmatpush.msra.mxu0 %v692
    %722 = vmatpush.msra.mxu0 %v691
    %723 = vmatpush.msra.mxu0 %v690
    %724 = vmatmul.f32.gmra.mxu0 %v703
    %v725 = vpop.f32.mrf.mxu0
    %v726 = vadd.f32 %v697, %v725
    %727 = vmatmul.f32.gmra.mxu0 %v706
    %v728 = vpop.f32.mrf.mxu0
    %v729 = vadd.f32 %v699, %v728
    %730 = vdwg.mxu0
    %v731 = vsel %vm279, %v726, -inf
    %732 = vmax.xlane.f32.xlu0 %v731
    %v733 = vpop.xlane.xlu0 %732
    %v734 = vsel %vm279, %v729, -inf
    %735 = vmax.xlane.f32.xlu0 %v734
    %v736 = vpop.xlane.xlu0 %735
    %v737 = vsub.f32 %v726, %v733
    %v738 = vsub.f32 %v729, %v736
    %v739 = vmul.f32 %v737, 1.442695
    %v740 = vpow.pop %v739
    %v741 = vmul.f32 %v738, 1.442695
    %v742 = vpow.pop %v741
    %751 = vrot.lane.b32.xlu0 %v598, 32
    %v752 = vpop.permute.xlu0 %751
    %753 = vrot.lane.b32.xlu0 %v599, 32
    %v754 = vpop.permute.xlu0 %753
    %755 = vrot.lane.b32.xlu0 %v600, 32
    %v756 = vpop.permute.xlu0 %755
    %757 = vrot.lane.b32.xlu0 %v601, 32
    %v758 = vpop.permute.xlu0 %757
    %759 = vrot.lane.b32.xlu0 %v602, 32
    %v760 = vpop.permute.xlu0 %759
    %761 = vrot.lane.b32.xlu0 %v603, 32
    %v762 = vpop.permute.xlu0 %761
    %763 = vrot.lane.b32.xlu0 %v604, 32
    %v764 = vpop.permute.xlu0 %763
    %765 = vrot.lane.b32.xlu0 %v605, 32
    %v766 = vpop.permute.xlu0 %765
    %v775 = vmul.f32 %v589, %v752
    %v776 = vmul.f32 %v592, %v754
    %v777 = vmul.f32 %v589, %v756
    %v778 = vmul.f32 %v592, %v758
    %v779 = vmul.f32 %v589, %v760
    %v780 = vmul.f32 %v592, %v762
    %v781 = vmul.f32 %v589, %v764
    %v782 = vmul.f32 %v592, %v766
    %791 = vrot.lane.b32.xlu0 %v775, 96
    %v792 = vpop.permute.xlu0 %791
    %793 = vrot.lane.b32.xlu0 %v776, 96
    %v794 = vpop.permute.xlu0 %793
    %795 = vrot.lane.b32.xlu0 %v777, 96
    %v796 = vpop.permute.xlu0 %795
    %797 = vrot.lane.b32.xlu0 %v778, 96
    %v798 = vpop.permute.xlu0 %797
    %799 = vrot.lane.b32.xlu0 %v779, 96
    %v800 = vpop.permute.xlu0 %799
    %801 = vrot.lane.b32.xlu0 %v780, 96
    %v802 = vpop.permute.xlu0 %801
    %803 = vrot.lane.b32.xlu0 %v781, 96
    %v804 = vpop.permute.xlu0 %803
    %805 = vrot.lane.b32.xlu0 %v782, 96
    %v806 = vpop.permute.xlu0 %805
    %v816 = vsel %vm279, %v740, 0
    %v819 = vsel %vm279, %v742, 0
    %821 = vmatpush.msra.mxu0 0.0
    %822 = vmatpush.msra.mxu0 0.0
    %823 = vmatpush.msra.mxu0 0.0
    %824 = vmatpush.msra.mxu0 0.0
    %825 = vmatpush.msra.mxu0 0.0
    %826 = vmatpush.msra.mxu0 0.0
    %827 = vmatpush.msra.mxu0 0.0
    %828 = vmatpush.msra.mxu0 0.0
    %829 = vmatpush.msra.mxu0 %v806
    %830 = vmatpush.msra.mxu0 %v804
    %831 = vmatpush.msra.mxu0 %v802
    %832 = vmatpush.msra.mxu0 %v800
    %833 = vmatpush.msra.mxu0 %v798
    %834 = vmatpush.msra.mxu0 %v796
    %835 = vmatpush.msra.mxu0 %v794
    %836 = vmatpush.msra.mxu0 %v792
    %837 = vmatmul.f32.gmra.mxu0 %v816
    %v838 = vpop.f32.mrf.mxu0
    %v839 = vadd.f32 0.0, %v838
    %840 = vmatmul.f32.gmra.mxu0 %v819
    %v841 = vpop.f32.mrf.mxu0
    %v842 = vadd.f32 0.0, %v841
    %843 = vdwg.mxu0
    %844 = vmatpush.msra.mxu0 0.0
    %845 = vmatpush.msra.mxu0 0.0
    %846 = vmatpush.msra.mxu0 0.0
    %847 = vmatpush.msra.mxu0 0.0
    %848 = vmatpush.msra.mxu0 0.0
    %849 = vmatpush.msra.mxu0 0.0
    %850 = vmatpush.msra.mxu0 0.0
    %851 = vmatpush.msra.mxu0 0.0
    %852 = vmatpush.msra.mxu0 %v605
    %853 = vmatpush.msra.mxu0 %v604
    %854 = vmatpush.msra.mxu0 %v603
    %855 = vmatpush.msra.mxu0 %v602
    %856 = vmatpush.msra.mxu0 %v601
    %857 = vmatpush.msra.mxu0 %v600
    %858 = vmatpush.msra.mxu0 %v599
    %859 = vmatpush.msra.mxu0 %v598
    %860 = vmatmul.f32.gmra.mxu0 %v816
    %v861 = vpop.f32.mrf.mxu0
    %v862 = vadd.f32 0.0, %v861
    %863 = vmatmul.f32.gmra.mxu0 %v819
    %v864 = vpop.f32.mrf.mxu0
    %v865 = vadd.f32 0.0, %v864
    %866 = vdwg.mxu0
    %v867 = vrcp.pop %v862
    %v868 = vrcp.pop %v865
    %v869 = vmul.f32 %v839, %v867
    %v870 = vmul.f32 %v842, %v868
    %v871 = vld [vmem:[#allocation2 + $0x40] sm:$0xff]
    %v872 = vld [vmem:[#allocation2 + $0x48] sm:$0xff]
    %v873 = vld [vmem:[#allocation2 + $0x50] sm:$0xff]
    %v874 = vld [vmem:[#allocation2 + $0x58] sm:$0xff]
    %v876 = vsel %vm41, %v869, 0
    %v879 = vsel %vm41, %v870, 0
    %881 = vmatpush.msra.mxu0 0.0
    %882 = vmatpush.msra.mxu0 0.0
    %883 = vmatpush.msra.mxu0 0.0
    %884 = vmatpush.msra.mxu0 0.0
    %885 = vmatpush.msra.mxu0 0.0
    %886 = vmatpush.msra.mxu0 0.0
    %887 = vmatpush.msra.mxu0 0.0
    %888 = vmatpush.msra.mxu0 0.0
    %889 = vmatpush.msra.mxu0 0.0
    %890 = vmatpush.msra.mxu0 0.0
    %891 = vmatpush.msra.mxu0 0.0
    %892 = vmatpush.msra.mxu0 0.0
    %893 = vmatpush.msra.mxu0 %v874
    %894 = vmatpush.msra.mxu0 %v873
    %895 = vmatpush.msra.mxu0 %v872
    %896 = vmatpush.msra.mxu0 %v871
    %897 = vmatmul.f32.gmra.mxu0 %v876
    %v898 = vpop.f32.mrf.mxu0
    %v899 = vadd.f32 0.0, %v898
    %900 = vmatmul.f32.gmra.mxu0 %v879
    %v901 = vpop.f32.mrf.mxu0
    %v902 = vadd.f32 0.0, %v901
    %903 = vdwg.mxu0
    %v904 = vadd.f32 %v460, %v899
    %v905 = vadd.f32 %v461, %v902
    %906 = vrot.lane.b32.xlu0 %v455, 32
    %v907 = vpop.permute.xlu0 %906
    %v909 = vadd.f32 %v904, %v907
    %v910 = vadd.f32 %v905, %v907
    %v911 = vsel %vm41, %v909, 0.0
    %912 = vadd.xlane.f32.xlu0 %v911
    %v913 = vpop.xlane.xlu0 %912
    %v914 = vsel %vm41, %v910, 0.0
    %915 = vadd.xlane.f32.xlu0 %v914
    %v916 = vpop.xlane.xlu0 %915
    %v917 = vmul.f32 %v913, %v54
    %v918 = vmul.f32 %v916, %v54
    %v919 = vmul.f32 %v909, %v909
    %v920 = vmul.f32 %v910, %v910
    %v921 = vsel %vm41, %v919, 0.0
    %922 = vadd.xlane.f32.xlu0 %v921
    %v923 = vpop.xlane.xlu0 %922
    %v924 = vsel %vm41, %v920, 0.0
    %925 = vadd.xlane.f32.xlu0 %v924
    %v926 = vpop.xlane.xlu0 %925
    %v927 = vmul.f32 %v923, %v54
    %v928 = vmul.f32 %v926, %v54
    %v929 = vmul.f32 %v917, %v917
    %v930 = vmul.f32 %v918, %v918
    %v931 = vsub.f32 %v927, %v929
    %v932 = vsub.f32 %v928, %v930
    %v933 = vmax.f32 %v931, 0.0
    %v934 = vmax.f32 %v932, 0.0
    %v935 = vsub.f32 %v909, %v917
    %v936 = vsub.f32 %v910, %v918
    %v937 = vadd.f32 %v933, 1e-06
    %v938 = vadd.f32 %v934, 1e-06
    %v939 = vrsqrt.pop %v937
    %v940 = vmul.f32 %v939, %v937
    %v941 = vmul.f32 %v940, %v939
    %v942 = vmul.f32 0.5, %v941
    %v943 = vsub.f32 1.5, %v942
    %v944 = vmul.f32 %v939, %v943
    %vm945 = vweird.f32 %v937
    %vm946 = vweird.f32 %v939
    %vm947 = vmor %vm945, %vm946
    %v948 = vsel %vm947, %v939, %v944
    %v949 = vrsqrt.pop %v938
    %v950 = vmul.f32 %v949, %v938
    %v951 = vmul.f32 %v950, %v949
    %v952 = vmul.f32 0.5, %v951
    %v953 = vsub.f32 1.5, %v952
    %v954 = vmul.f32 %v949, %v953
    %vm955 = vweird.f32 %v938
    %vm956 = vweird.f32 %v949
    %vm957 = vmor %vm955, %vm956
    %v958 = vsel %vm957, %v949, %v954
    %v959 = vmul.f32 %v935, %v948
    %v960 = vmul.f32 %v936, %v958
    %v961 = vmul.f32 %v959, %v455
    %v962 = vmul.f32 %v960, %v455
    %963 = vrot.lane.b32.xlu0 %v455, 96
    %v964 = vpop.permute.xlu0 %963
    %v966 = vadd.f32 %v961, %v964
    %v967 = vadd.f32 %v962, %v964
    %v968 = vld [vmem:[#allocation2 + $0xa0] sm:$0xff]
    %v969 = vld [vmem:[#allocation2 + $0xa8] sm:$0xff]
    %v970 = vld [vmem:[#allocation2 + $0xb0] sm:$0xff]
    %v971 = vld [vmem:[#allocation2 + $0xb8] sm:$0xff]
    %973 = vrot.lane.b32.xlu0 %v564, 64
    %v974 = vpop.permute.xlu0 %973
    %v977 = vsel %vm41, %v966, 0
    %v980 = vsel %vm41, %v967, 0
    %982 = vmatpush.msra.mxu0 0.0
    %983 = vmatpush.msra.mxu0 0.0
    %984 = vmatpush.msra.mxu0 0.0
    %985 = vmatpush.msra.mxu0 0.0
    %986 = vmatpush.msra.mxu0 0.0
    %987 = vmatpush.msra.mxu0 0.0
    %988 = vmatpush.msra.mxu0 0.0
    %989 = vmatpush.msra.mxu0 0.0
    %990 = vmatpush.msra.mxu0 0.0
    %991 = vmatpush.msra.mxu0 0.0
    %992 = vmatpush.msra.mxu0 0.0
    %993 = vmatpush.msra.mxu0 0.0
    %994 = vmatpush.msra.mxu0 %v971
    %995 = vmatpush.msra.mxu0 %v970
    %996 = vmatpush.msra.mxu0 %v969
    %997 = vmatpush.msra.mxu0 %v968
    %998 = vmatmul.f32.gmra.mxu0 %v977
    %v999 = vpop.f32.mrf.mxu0
    %v1000 = vadd.f32 %v974, %v999
    %1001 = vmatmul.f32.gmra.mxu0 %v980
    %v1002 = vpop.f32.mrf.mxu0
    %v1003 = vadd.f32 %v974, %v1002
    %1004 = vdwg.mxu0
    %v1005 = vmax.f32 %v1000, 0.0
    %v1006 = vmax.f32 %v1003, 0.0
    %v1007 = vld [vmem:[#allocation2 + $0xc0] sm:$0xff]
    %v1008 = vld [vmem:[#allocation2 + $0xc8] sm:$0xff]
    %v1009 = vld [vmem:[#allocation2 + $0xd0] sm:$0xff]
    %v1010 = vld [vmem:[#allocation2 + $0xd8] sm:$0xff]
    %v1011 = vld [vmem:[#allocation2 + $0xe0] sm:$0xff]
    %v1012 = vld [vmem:[#allocation2 + $0xe8] sm:$0xff]
    %v1013 = vld [vmem:[#allocation2 + $0xf0] sm:$0xff]
    %v1014 = vld [vmem:[#allocation2 + $0xf8] sm:$0xff]
    %v1016 = vsel %vm279, %v1005, 0
    %v1019 = vsel %vm279, %v1006, 0
    %1021 = vmatpush.msra.mxu0 0.0
    %1022 = vmatpush.msra.mxu0 0.0
    %1023 = vmatpush.msra.mxu0 0.0
    %1024 = vmatpush.msra.mxu0 0.0
    %1025 = vmatpush.msra.mxu0 0.0
    %1026 = vmatpush.msra.mxu0 0.0
    %1027 = vmatpush.msra.mxu0 0.0
    %1028 = vmatpush.msra.mxu0 0.0
    %1029 = vmatpush.msra.mxu0 %v1014
    %1030 = vmatpush.msra.mxu0 %v1013
    %1031 = vmatpush.msra.mxu0 %v1012
    %1032 = vmatpush.msra.mxu0 %v1011
    %1033 = vmatpush.msra.mxu0 %v1010
    %1034 = vmatpush.msra.mxu0 %v1009
    %1035 = vmatpush.msra.mxu0 %v1008
    %1036 = vmatpush.msra.mxu0 %v1007
    %1037 = vmatmul.f32.gmra.mxu0 %v1016
    %v1038 = vpop.f32.mrf.mxu0
    %v1039 = vadd.f32 0.0, %v1038
    %1040 = vmatmul.f32.gmra.mxu0 %v1019
    %v1041 = vpop.f32.mrf.mxu0
    %v1042 = vadd.f32 0.0, %v1041
    %1043 = vdwg.mxu0
    %v1044 = vadd.f32 %v909, %v1039
    %v1045 = vadd.f32 %v910, %v1042
    %v1046 = vadd.f32 %v1044, %v526
    %v1047 = vadd.f32 %v1045, %v526
    %1048 = vst.msk [vmem:[#allocation5] sm:$0xff] %vm41, %v1046
    %1049 = vst.msk [vmem:[#allocation5 + $0x8] sm:$0xff] %vm41, %v1047
    // Predicated region
    $region22: #{run.1} parent=1 // pred_check
      _
    $region23: #{run.1} parent=1 // pred_check_branch
      %1051 = sbr.rel (0) target = $region25
    $region24: #{run.1} parent=1 // pred_region
      %1053 = vsyncadd [#allocation4], 0
      %s1054 = sshll.u32 [#allocation5], 4
      %s1055 = int_to_ptr.vmem [resolvable:$true] %s1054
      %s1056 = sshll.u32 %s4, 4
      %s1057 = int_to_ptr.hbm [resolvable:$true] %s1056
      %1062 = dma.vmem_to_hbm [thread:$0]  %s1055, 256, %s1057, [#allocation4], 128, 128, 8
    $region25: #{run.1} parent=1 // pred_fallthru
      _
    // Predicated region
    $region26: #{run.1} parent=1 // pred_check
      _
    $region27: #{run.1} parent=1 // pred_check_branch
      %1064 = sbr.rel (0) target = $region29
    $region28: #{run.1} parent=1 // pred_region
      %1066 = dma.done [#allocation4], 256
    $region29: #{run.1} parent=1 // pred_fallthru
      _
    %1067 = vsyncpa [#allocation3], 1
    %1068 = vsyncpa [#allocation4], 1

</llo_original>
